<compile_context>
chip_gen: v7x
topology: tpu7x:2x2x1
jax: 0.10.0
libtpu: 0.0.40
codegen_flags: <defaults>
</compile_context>

<pallas_src>
import functools

import jax
import jax.numpy as jnp
from jax.experimental import pallas as pl
from jax.experimental.pallas import tpu as pltpu


def bilstm_kernel(x_ref,        # (T*B, I)  bf16, time-major (row = t*B + b)
                  w_in_ref,     # (I, 8H)   bf16, [w_ih_f | w_ih_b] (transposed)
                  b_in_ref,     # (1, 8H)   f32,  [b_ih_f+b_hh_f | b_ih_b+b_hh_b]
                  whh_f_ref,    # (H, 4H)   bf16, forward recurrent weight (transposed)
                  wfc_f_ref,    # (H, O)    bf16, top half of fc weight (transposed)
                  wfc_b_ref,    # (H, O)    bf16, bottom half of fc weight (transposed)
                  bfc_ref,      # (1, O)    f32
                  out_ref,      # (B, O)    f32
                  *, B, T, H):
    # ---- Hoisted input projection (both directions, one MXU pass, off the chain).
    proj = (jnp.dot(x_ref[...], w_in_ref[...],
                    preferred_element_type=jnp.float32)
            + b_in_ref[...])                               # (T*B, 8H) f32

    whh_f = whh_f_ref[...]                                 # (H, 4H) bf16

    def gates_to_hc(gates, c):
        # One full-width sigmoid push (covers i, f, o) + one tanh push for g.
        sig = jax.nn.sigmoid(gates)                        # (B, 4H)
        g = jnp.tanh(gates[:, 2 * H:3 * H])                # (B, H)
        i_g = sig[:, 0 * H:1 * H]
        f_g = sig[:, 1 * H:2 * H]
        o_g = sig[:, 3 * H:4 * H]
        c_new = f_g * c + i_g * g
        h_new = o_g * jnp.tanh(c_new)
        return h_new, c_new

    # ---- Forward recurrence: only h @ whh_f remains on the serial chain.
    h_f = jnp.zeros((B, H), jnp.float32)
    c_f = jnp.zeros((B, H), jnp.float32)
    for t in range(T):                                     # T static -> unrolled
        gx = proj[t * B:(t + 1) * B, 0:4 * H]              # precomputed x-gates (f32)
        gates = gx + jnp.dot(h_f.astype(jnp.bfloat16), whh_f,
                             preferred_element_type=jnp.float32)
        h_f, c_f = gates_to_hc(gates, c_f)

    # ---- Backward direction: single step from zero state at t = T-1, so its
    # gates are exactly the precomputed projection (no h @ whh_b, no f*c term).
    gates_b = proj[(T - 1) * B:T * B, 4 * H:8 * H]         # (B, 4H)
    sig_b = jax.nn.sigmoid(gates_b)
    g_b = jnp.tanh(gates_b[:, 2 * H:3 * H])
    c_b = sig_b[:, 0:H] * g_b                              # i * g   (f * c0 == 0)
    h_b = sig_b[:, 3 * H:4 * H] * jnp.tanh(c_b)            # o * tanh(c)

    # ---- FC without the 2H concat: two small matmuls accumulate in f32.
    y = (jnp.dot(h_f.astype(jnp.bfloat16), wfc_f_ref[...],
                 preferred_element_type=jnp.float32)
         + jnp.dot(h_b.astype(jnp.bfloat16), wfc_b_ref[...],
                   preferred_element_type=jnp.float32)
         + bfc_ref[...])
    out_ref[...] = y.astype(out_ref.dtype)


def bilstm_predictor(x, params):
    """x: (B, T, I) float32 -> (B, O) float32."""
    B, T, I = x.shape
    H = params["w_hh_f"].shape[1]
    O = params["w_fc"].shape[0]
    bf16 = jnp.bfloat16

    # Time-major flatten so the hoisted projection is one (T*B, I) @ (I, 8H)
    # matmul with contiguous per-timestep row slices inside the kernel.
    x_tb = jnp.swapaxes(x, 0, 1).reshape(T * B, I).astype(bf16)

    w_in = jnp.concatenate(
        [params["w_ih_f"].T, params["w_ih_b"].T], axis=1).astype(bf16)      # (I, 8H)
    b_in = jnp.concatenate(
        [params["b_ih_f"] + params["b_hh_f"],
         params["b_ih_b"] + params["b_hh_b"]]).reshape(1, 8 * H).astype(jnp.float32)
    whh_f = params["w_hh_f"].T.astype(bf16)                                 # (H, 4H)
    wfc_f = params["w_fc"][:, :H].T.astype(bf16)                            # (H, O)
    wfc_b = params["w_fc"][:, H:].T.astype(bf16)                            # (H, O)
    b_fc = params["b_fc"].reshape(1, O).astype(jnp.float32)

    args = (x_tb, w_in, b_in, whh_f, wfc_f, wfc_b, b_fc)
    vmem = pl.BlockSpec(memory_space=pltpu.MemorySpace.VMEM)

    # Whole arrays resident in VMEM (few KiB total); no grid — the kernel is
    # latency-bound on the serial recurrence, tiling would only add overhead.
    # TODO(synk): if B grows beyond a few sublane tiles, add a batch grid axis
    # with dimension_semantics=("parallel",) to use both v7x TensorCores.
    return pl.pallas_call(
        functools.partial(bilstm_kernel, B=B, T=T, H=H),
        out_shape=jax.ShapeDtypeStruct((B, O), jnp.float32),
        in_specs=[vmem] * len(args),
        out_specs=vmem,
    )(*args)


def _reference(x, params):
    """Pure-JAX f32 reference: full bidirectional LSTM, then fc(out[:, -1, :])."""
    H = params["w_hh_f"].shape[1]
    T = x.shape[1]

    def run_dir(xs, w_ih, w_hh, b_ih, b_hh):
        def step(carry, x_t):
            h, c = carry
            gates = x_t @ w_ih.T + h @ w_hh.T + b_ih + b_hh
            i = jax.nn.sigmoid(gates[:, 0 * H:1 * H])
            f = jax.nn.sigmoid(gates[:, 1 * H:2 * H])
            g = jnp.tanh(gates[:, 2 * H:3 * H])
            o = jax.nn.sigmoid(gates[:, 3 * H:4 * H])
            c = f * c + i * g
            h = o * jnp.tanh(c)
            return (h, c), h
        B = xs.shape[1]
        init = (jnp.zeros((B, H), jnp.float32), jnp.zeros((B, H), jnp.float32))
        _, hs = jax.lax.scan(step, init, xs)
        return hs                                          # (T, B, H)

    xs = jnp.swapaxes(x, 0, 1)                             # (T, B, I)
    h_fwd = run_dir(xs, params["w_ih_f"], params["w_hh_f"],
                    params["b_ih_f"], params["b_hh_f"])
    h_bwd = run_dir(xs[::-1], params["w_ih_b"], params["w_hh_b"],
                    params["b_ih_b"], params["b_hh_b"])[::-1]
    out = jnp.concatenate([h_fwd, h_bwd], axis=-1)         # (T, B, 2H)
    last = out[T - 1]                                      # (B, 2H)
    return last @ params["w_fc"].T + params["b_fc"]


def init_params(key, input_size, hidden_size, output_size):
    k = 1.0 / jnp.sqrt(hidden_size)
    names_shapes = [
        ("w_ih_f", (4 * hidden_size, input_size)),
        ("w_hh_f", (4 * hidden_size, hidden_size)),
        ("b_ih_f", (4 * hidden_size,)),
        ("b_hh_f", (4 * hidden_size,)),
        ("w_ih_b", (4 * hidden_size, input_size)),
        ("w_hh_b", (4 * hidden_size, hidden_size)),
        ("b_ih_b", (4 * hidden_size,)),
        ("b_hh_b", (4 * hidden_size,)),
        ("w_fc", (output_size, 2 * hidden_size)),
        ("b_fc", (output_size,)),
    ]
    keys = jax.random.split(key, len(names_shapes))
    return {n: jax.random.uniform(kk, s, jnp.float32, -k, k)
            for kk, (n, s) in zip(keys, names_shapes)}


if __name__ == "__main__":
    INPUT_SIZE, HIDDEN_SIZE, OUTPUT_SIZE = 16, 32, 4
    B, T = 2, 8

    key = jax.random.PRNGKey(0)
    k_x, k_p = jax.random.split(key)
    x = jax.random.normal(k_x, (B, T, INPUT_SIZE), jnp.float32)
    params = init_params(k_p, INPUT_SIZE, HIDDEN_SIZE, OUTPUT_SIZE)

    y = jax.block_until_ready(bilstm_predictor(x, params))
    y_ref = jax.block_until_ready(_reference(x, params))

    assert y.shape == (B, OUTPUT_SIZE)
    # bf16 matmul operands (f32 state/accumulation) -> loosened tolerance vs f32 ref.
    assert jnp.allclose(y, y_ref, atol=5e-2, rtol=5e-2), (y, y_ref)

    print("KERNEL_OK")
</pallas_src>

<mosaic_0001>
module attributes {stable_mosaic.version = 11 : i64} {
  func.func @bilstm_kernel(%arg0: memref<16x16xbf16, #tpu.memory_space<vmem>>, %arg1: memref<16x256xbf16, #tpu.memory_space<vmem>>, %arg2: memref<1x256xf32, #tpu.memory_space<vmem>>, %arg3: memref<32x128xbf16, #tpu.memory_space<vmem>>, %arg4: memref<32x4xbf16, #tpu.memory_space<vmem>>, %arg5: memref<32x4xbf16, #tpu.memory_space<vmem>>, %arg6: memref<1x4xf32, #tpu.memory_space<vmem>>, %arg7: memref<2x4xf32, #tpu.memory_space<vmem>>) attributes {dimension_semantics = [], scalar_prefetch = 0 : i64, scratch_operands = 0 : i64, tpu.core_type = #tpu.core_type<tc>} {
    %c0 = arith.constant 0 : index
    %c0_0 = arith.constant 0 : index
    %0 = vector.load %arg0[%c0, %c0_0] : memref<16x16xbf16, #tpu.memory_space<vmem>>, vector<16x16xbf16>
    %c0_1 = arith.constant 0 : index
    %c0_2 = arith.constant 0 : index
    %1 = vector.load %arg1[%c0_1, %c0_2] : memref<16x256xbf16, #tpu.memory_space<vmem>>, vector<16x256xbf16>
    %cst = arith.constant dense<0.000000e+00> : vector<16x256xf32>
    %2 = tpu.matmul %0, %1, %cst {dimension_numbers = #tpu.dot_dimension_numbers<[1], [0], [0], [1], [0, 0, 1, 1], [], []>} : vector<16x16xbf16>, vector<16x256xbf16>, vector<16x256xf32> -> vector<16x256xf32>
    %c0_3 = arith.constant 0 : index
    %c0_4 = arith.constant 0 : index
    %3 = vector.load %arg2[%c0_3, %c0_4] : memref<1x256xf32, #tpu.memory_space<vmem>>, vector<1x256xf32>
    %4 = vector.broadcast %3 : vector<1x256xf32> to vector<16x256xf32>
    %5 = arith.addf %2, %4 : vector<16x256xf32>
    %c0_5 = arith.constant 0 : index
    %c0_6 = arith.constant 0 : index
    %6 = vector.load %arg3[%c0_5, %c0_6] : memref<32x128xbf16, #tpu.memory_space<vmem>>, vector<32x128xbf16>
    %cst_7 = arith.constant 0.000000e+00 : f32
    %7 = vector.broadcast %cst_7 : f32 to vector<2x32xf32>
    %cst_8 = arith.constant 0.000000e+00 : f32
    %8 = vector.broadcast %cst_8 : f32 to vector<2x32xf32>
    %9 = vector.extract_strided_slice %5 {offsets = [0, 0], sizes = [2, 128], strides = [1, 1]} : vector<16x256xf32> to vector<2x128xf32>
    %10 = arith.truncf %7 : vector<2x32xf32> to vector<2x32xbf16>
    %cst_9 = arith.constant dense<0.000000e+00> : vector<2x128xf32>
    %11 = tpu.matmul %10, %6, %cst_9 {dimension_numbers = #tpu.dot_dimension_numbers<[1], [0], [0], [1], [0, 0, 1, 1], [], []>} : vector<2x32xbf16>, vector<32x128xbf16>, vector<2x128xf32> -> vector<2x128xf32>
    %12 = arith.addf %9, %11 : vector<2x128xf32>
    %13 = arith.negf %12 : vector<2x128xf32>
    %14 = math.exp %13 : vector<2x128xf32>
    %cst_10 = arith.constant 1.000000e+00 : f32
    %15 = vector.broadcast %cst_10 : f32 to vector<2x128xf32>
    %16 = arith.addf %15, %14 : vector<2x128xf32>
    %17 = arith.divf %15, %16 : vector<2x128xf32>
    %18 = vector.extract_strided_slice %12 {offsets = [0, 64], sizes = [2, 32], strides = [1, 1]} : vector<2x128xf32> to vector<2x32xf32>
    %19 = math.tanh %18 : vector<2x32xf32>
    %20 = vector.extract_strided_slice %17 {offsets = [0, 0], sizes = [2, 32], strides = [1, 1]} : vector<2x128xf32> to vector<2x32xf32>
    %21 = vector.extract_strided_slice %17 {offsets = [0, 32], sizes = [2, 32], strides = [1, 1]} : vector<2x128xf32> to vector<2x32xf32>
    %22 = vector.extract_strided_slice %17 {offsets = [0, 96], sizes = [2, 32], strides = [1, 1]} : vector<2x128xf32> to vector<2x32xf32>
    %23 = arith.mulf %21, %8 : vector<2x32xf32>
    %24 = arith.mulf %20, %19 : vector<2x32xf32>
    %25 = arith.addf %23, %24 : vector<2x32xf32>
    %26 = math.tanh %25 : vector<2x32xf32>
    %27 = arith.mulf %22, %26 : vector<2x32xf32>
    %28 = vector.extract_strided_slice %5 {offsets = [2, 0], sizes = [2, 128], strides = [1, 1]} : vector<16x256xf32> to vector<2x128xf32>
    %29 = arith.truncf %27 : vector<2x32xf32> to vector<2x32xbf16>
    %cst_11 = arith.constant dense<0.000000e+00> : vector<2x128xf32>
    %30 = tpu.matmul %29, %6, %cst_11 {dimension_numbers = #tpu.dot_dimension_numbers<[1], [0], [0], [1], [0, 0, 1, 1], [], []>} : vector<2x32xbf16>, vector<32x128xbf16>, vector<2x128xf32> -> vector<2x128xf32>
    %31 = arith.addf %28, %30 : vector<2x128xf32>
    %32 = arith.negf %31 : vector<2x128xf32>
    %33 = math.exp %32 : vector<2x128xf32>
    %cst_12 = arith.constant 1.000000e+00 : f32
    %34 = vector.broadcast %cst_12 : f32 to vector<2x128xf32>
    %35 = arith.addf %34, %33 : vector<2x128xf32>
    %36 = arith.divf %34, %35 : vector<2x128xf32>
    %37 = vector.extract_strided_slice %31 {offsets = [0, 64], sizes = [2, 32], strides = [1, 1]} : vector<2x128xf32> to vector<2x32xf32>
    %38 = math.tanh %37 : vector<2x32xf32>
    %39 = vector.extract_strided_slice %36 {offsets = [0, 0], sizes = [2, 32], strides = [1, 1]} : vector<2x128xf32> to vector<2x32xf32>
    %40 = vector.extract_strided_slice %36 {offsets = [0, 32], sizes = [2, 32], strides = [1, 1]} : vector<2x128xf32> to vector<2x32xf32>
    %41 = vector.extract_strided_slice %36 {offsets = [0, 96], sizes = [2, 32], strides = [1, 1]} : vector<2x128xf32> to vector<2x32xf32>
    %42 = arith.mulf %40, %25 : vector<2x32xf32>
    %43 = arith.mulf %39, %38 : vector<2x32xf32>
    %44 = arith.addf %42, %43 : vector<2x32xf32>
    %45 = math.tanh %44 : vector<2x32xf32>
    %46 = arith.mulf %41, %45 : vector<2x32xf32>
    %47 = vector.extract_strided_slice %5 {offsets = [4, 0], sizes = [2, 128], strides = [1, 1]} : vector<16x256xf32> to vector<2x128xf32>
    %48 = arith.truncf %46 : vector<2x32xf32> to vector<2x32xbf16>
    %cst_13 = arith.constant dense<0.000000e+00> : vector<2x128xf32>
    %49 = tpu.matmul %48, %6, %cst_13 {dimension_numbers = #tpu.dot_dimension_numbers<[1], [0], [0], [1], [0, 0, 1, 1], [], []>} : vector<2x32xbf16>, vector<32x128xbf16>, vector<2x128xf32> -> vector<2x128xf32>
    %50 = arith.addf %47, %49 : vector<2x128xf32>
    %51 = arith.negf %50 : vector<2x128xf32>
    %52 = math.exp %51 : vector<2x128xf32>
    %cst_14 = arith.constant 1.000000e+00 : f32
    %53 = vector.broadcast %cst_14 : f32 to vector<2x128xf32>
    %54 = arith.addf %53, %52 : vector<2x128xf32>
    %55 = arith.divf %53, %54 : vector<2x128xf32>
    %56 = vector.extract_strided_slice %50 {offsets = [0, 64], sizes = [2, 32], strides = [1, 1]} : vector<2x128xf32> to vector<2x32xf32>
    %57 = math.tanh %56 : vector<2x32xf32>
    %58 = vector.extract_strided_slice %55 {offsets = [0, 0], sizes = [2, 32], strides = [1, 1]} : vector<2x128xf32> to vector<2x32xf32>
    %59 = vector.extract_strided_slice %55 {offsets = [0, 32], sizes = [2, 32], strides = [1, 1]} : vector<2x128xf32> to vector<2x32xf32>
    %60 = vector.extract_strided_slice %55 {offsets = [0, 96], sizes = [2, 32], strides = [1, 1]} : vector<2x128xf32> to vector<2x32xf32>
    %61 = arith.mulf %59, %44 : vector<2x32xf32>
    %62 = arith.mulf %58, %57 : vector<2x32xf32>
    %63 = arith.addf %61, %62 : vector<2x32xf32>
    %64 = math.tanh %63 : vector<2x32xf32>
    %65 = arith.mulf %60, %64 : vector<2x32xf32>
    %66 = vector.extract_strided_slice %5 {offsets = [6, 0], sizes = [2, 128], strides = [1, 1]} : vector<16x256xf32> to vector<2x128xf32>
    %67 = arith.truncf %65 : vector<2x32xf32> to vector<2x32xbf16>
    %cst_15 = arith.constant dense<0.000000e+00> : vector<2x128xf32>
    %68 = tpu.matmul %67, %6, %cst_15 {dimension_numbers = #tpu.dot_dimension_numbers<[1], [0], [0], [1], [0, 0, 1, 1], [], []>} : vector<2x32xbf16>, vector<32x128xbf16>, vector<2x128xf32> -> vector<2x128xf32>
    %69 = arith.addf %66, %68 : vector<2x128xf32>
    %70 = arith.negf %69 : vector<2x128xf32>
    %71 = math.exp %70 : vector<2x128xf32>
    %cst_16 = arith.constant 1.000000e+00 : f32
    %72 = vector.broadcast %cst_16 : f32 to vector<2x128xf32>
    %73 = arith.addf %72, %71 : vector<2x128xf32>
    %74 = arith.divf %72, %73 : vector<2x128xf32>
    %75 = vector.extract_strided_slice %69 {offsets = [0, 64], sizes = [2, 32], strides = [1, 1]} : vector<2x128xf32> to vector<2x32xf32>
    %76 = math.tanh %75 : vector<2x32xf32>
    %77 = vector.extract_strided_slice %74 {offsets = [0, 0], sizes = [2, 32], strides = [1, 1]} : vector<2x128xf32> to vector<2x32xf32>
    %78 = vector.extract_strided_slice %74 {offsets = [0, 32], sizes = [2, 32], strides = [1, 1]} : vector<2x128xf32> to vector<2x32xf32>
    %79 = vector.extract_strided_slice %74 {offsets = [0, 96], sizes = [2, 32], strides = [1, 1]} : vector<2x128xf32> to vector<2x32xf32>
    %80 = arith.mulf %78, %63 : vector<2x32xf32>
    %81 = arith.mulf %77, %76 : vector<2x32xf32>
    %82 = arith.addf %80, %81 : vector<2x32xf32>
    %83 = math.tanh %82 : vector<2x32xf32>
    %84 = arith.mulf %79, %83 : vector<2x32xf32>
    %85 = vector.extract_strided_slice %5 {offsets = [8, 0], sizes = [2, 128], strides = [1, 1]} : vector<16x256xf32> to vector<2x128xf32>
    %86 = arith.truncf %84 : vector<2x32xf32> to vector<2x32xbf16>
    %cst_17 = arith.constant dense<0.000000e+00> : vector<2x128xf32>
    %87 = tpu.matmul %86, %6, %cst_17 {dimension_numbers = #tpu.dot_dimension_numbers<[1], [0], [0], [1], [0, 0, 1, 1], [], []>} : vector<2x32xbf16>, vector<32x128xbf16>, vector<2x128xf32> -> vector<2x128xf32>
    %88 = arith.addf %85, %87 : vector<2x128xf32>
    %89 = arith.negf %88 : vector<2x128xf32>
    %90 = math.exp %89 : vector<2x128xf32>
    %cst_18 = arith.constant 1.000000e+00 : f32
    %91 = vector.broadcast %cst_18 : f32 to vector<2x128xf32>
    %92 = arith.addf %91, %90 : vector<2x128xf32>
    %93 = arith.divf %91, %92 : vector<2x128xf32>
    %94 = vector.extract_strided_slice %88 {offsets = [0, 64], sizes = [2, 32], strides = [1, 1]} : vector<2x128xf32> to vector<2x32xf32>
    %95 = math.tanh %94 : vector<2x32xf32>
    %96 = vector.extract_strided_slice %93 {offsets = [0, 0], sizes = [2, 32], strides = [1, 1]} : vector<2x128xf32> to vector<2x32xf32>
    %97 = vector.extract_strided_slice %93 {offsets = [0, 32], sizes = [2, 32], strides = [1, 1]} : vector<2x128xf32> to vector<2x32xf32>
    %98 = vector.extract_strided_slice %93 {offsets = [0, 96], sizes = [2, 32], strides = [1, 1]} : vector<2x128xf32> to vector<2x32xf32>
    %99 = arith.mulf %97, %82 : vector<2x32xf32>
    %100 = arith.mulf %96, %95 : vector<2x32xf32>
    %101 = arith.addf %99, %100 : vector<2x32xf32>
    %102 = math.tanh %101 : vector<2x32xf32>
    %103 = arith.mulf %98, %102 : vector<2x32xf32>
    %104 = vector.extract_strided_slice %5 {offsets = [10, 0], sizes = [2, 128], strides = [1, 1]} : vector<16x256xf32> to vector<2x128xf32>
    %105 = arith.truncf %103 : vector<2x32xf32> to vector<2x32xbf16>
    %cst_19 = arith.constant dense<0.000000e+00> : vector<2x128xf32>
    %106 = tpu.matmul %105, %6, %cst_19 {dimension_numbers = #tpu.dot_dimension_numbers<[1], [0], [0], [1], [0, 0, 1, 1], [], []>} : vector<2x32xbf16>, vector<32x128xbf16>, vector<2x128xf32> -> vector<2x128xf32>
    %107 = arith.addf %104, %106 : vector<2x128xf32>
    %108 = arith.negf %107 : vector<2x128xf32>
    %109 = math.exp %108 : vector<2x128xf32>
    %cst_20 = arith.constant 1.000000e+00 : f32
    %110 = vector.broadcast %cst_20 : f32 to vector<2x128xf32>
    %111 = arith.addf %110, %109 : vector<2x128xf32>
    %112 = arith.divf %110, %111 : vector<2x128xf32>
    %113 = vector.extract_strided_slice %107 {offsets = [0, 64], sizes = [2, 32], strides = [1, 1]} : vector<2x128xf32> to vector<2x32xf32>
    %114 = math.tanh %113 : vector<2x32xf32>
    %115 = vector.extract_strided_slice %112 {offsets = [0, 0], sizes = [2, 32], strides = [1, 1]} : vector<2x128xf32> to vector<2x32xf32>
    %116 = vector.extract_strided_slice %112 {offsets = [0, 32], sizes = [2, 32], strides = [1, 1]} : vector<2x128xf32> to vector<2x32xf32>
    %117 = vector.extract_strided_slice %112 {offsets = [0, 96], sizes = [2, 32], strides = [1, 1]} : vector<2x128xf32> to vector<2x32xf32>
    %118 = arith.mulf %116, %101 : vector<2x32xf32>
    %119 = arith.mulf %115, %114 : vector<2x32xf32>
    %120 = arith.addf %118, %119 : vector<2x32xf32>
    %121 = math.tanh %120 : vector<2x32xf32>
    %122 = arith.mulf %117, %121 : vector<2x32xf32>
    %123 = vector.extract_strided_slice %5 {offsets = [12, 0], sizes = [2, 128], strides = [1, 1]} : vector<16x256xf32> to vector<2x128xf32>
    %124 = arith.truncf %122 : vector<2x32xf32> to vector<2x32xbf16>
    %cst_21 = arith.constant dense<0.000000e+00> : vector<2x128xf32>
    %125 = tpu.matmul %124, %6, %cst_21 {dimension_numbers = #tpu.dot_dimension_numbers<[1], [0], [0], [1], [0, 0, 1, 1], [], []>} : vector<2x32xbf16>, vector<32x128xbf16>, vector<2x128xf32> -> vector<2x128xf32>
    %126 = arith.addf %123, %125 : vector<2x128xf32>
    %127 = arith.negf %126 : vector<2x128xf32>
    %128 = math.exp %127 : vector<2x128xf32>
    %cst_22 = arith.constant 1.000000e+00 : f32
    %129 = vector.broadcast %cst_22 : f32 to vector<2x128xf32>
    %130 = arith.addf %129, %128 : vector<2x128xf32>
    %131 = arith.divf %129, %130 : vector<2x128xf32>
    %132 = vector.extract_strided_slice %126 {offsets = [0, 64], sizes = [2, 32], strides = [1, 1]} : vector<2x128xf32> to vector<2x32xf32>
    %133 = math.tanh %132 : vector<2x32xf32>
    %134 = vector.extract_strided_slice %131 {offsets = [0, 0], sizes = [2, 32], strides = [1, 1]} : vector<2x128xf32> to vector<2x32xf32>
    %135 = vector.extract_strided_slice %131 {offsets = [0, 32], sizes = [2, 32], strides = [1, 1]} : vector<2x128xf32> to vector<2x32xf32>
    %136 = vector.extract_strided_slice %131 {offsets = [0, 96], sizes = [2, 32], strides = [1, 1]} : vector<2x128xf32> to vector<2x32xf32>
    %137 = arith.mulf %135, %120 : vector<2x32xf32>
    %138 = arith.mulf %134, %133 : vector<2x32xf32>
    %139 = arith.addf %137, %138 : vector<2x32xf32>
    %140 = math.tanh %139 : vector<2x32xf32>
    %141 = arith.mulf %136, %140 : vector<2x32xf32>
    %142 = vector.extract_strided_slice %5 {offsets = [14, 0], sizes = [2, 128], strides = [1, 1]} : vector<16x256xf32> to vector<2x128xf32>
    %143 = arith.truncf %141 : vector<2x32xf32> to vector<2x32xbf16>
    %cst_23 = arith.constant dense<0.000000e+00> : vector<2x128xf32>
    %144 = tpu.matmul %143, %6, %cst_23 {dimension_numbers = #tpu.dot_dimension_numbers<[1], [0], [0], [1], [0, 0, 1, 1], [], []>} : vector<2x32xbf16>, vector<32x128xbf16>, vector<2x128xf32> -> vector<2x128xf32>
    %145 = arith.addf %142, %144 : vector<2x128xf32>
    %146 = arith.negf %145 : vector<2x128xf32>
    %147 = math.exp %146 : vector<2x128xf32>
    %cst_24 = arith.constant 1.000000e+00 : f32
    %148 = vector.broadcast %cst_24 : f32 to vector<2x128xf32>
    %149 = arith.addf %148, %147 : vector<2x128xf32>
    %150 = arith.divf %148, %149 : vector<2x128xf32>
    %151 = vector.extract_strided_slice %145 {offsets = [0, 64], sizes = [2, 32], strides = [1, 1]} : vector<2x128xf32> to vector<2x32xf32>
    %152 = math.tanh %151 : vector<2x32xf32>
    %153 = vector.extract_strided_slice %150 {offsets = [0, 0], sizes = [2, 32], strides = [1, 1]} : vector<2x128xf32> to vector<2x32xf32>
    %154 = vector.extract_strided_slice %150 {offsets = [0, 32], sizes = [2, 32], strides = [1, 1]} : vector<2x128xf32> to vector<2x32xf32>
    %155 = vector.extract_strided_slice %150 {offsets = [0, 96], sizes = [2, 32], strides = [1, 1]} : vector<2x128xf32> to vector<2x32xf32>
    %156 = arith.mulf %154, %139 : vector<2x32xf32>
    %157 = arith.mulf %153, %152 : vector<2x32xf32>
    %158 = arith.addf %156, %157 : vector<2x32xf32>
    %159 = math.tanh %158 : vector<2x32xf32>
    %160 = arith.mulf %155, %159 : vector<2x32xf32>
    %161 = vector.extract_strided_slice %5 {offsets = [14, 128], sizes = [2, 128], strides = [1, 1]} : vector<16x256xf32> to vector<2x128xf32>
    %162 = arith.negf %161 : vector<2x128xf32>
    %163 = math.exp %162 : vector<2x128xf32>
    %cst_25 = arith.constant 1.000000e+00 : f32
    %164 = vector.broadcast %cst_25 : f32 to vector<2x128xf32>
    %165 = arith.addf %164, %163 : vector<2x128xf32>
    %166 = arith.divf %164, %165 : vector<2x128xf32>
    %167 = vector.extract_strided_slice %161 {offsets = [0, 64], sizes = [2, 32], strides = [1, 1]} : vector<2x128xf32> to vector<2x32xf32>
    %168 = math.tanh %167 : vector<2x32xf32>
    %169 = vector.extract_strided_slice %166 {offsets = [0, 0], sizes = [2, 32], strides = [1, 1]} : vector<2x128xf32> to vector<2x32xf32>
    %170 = arith.mulf %169, %168 : vector<2x32xf32>
    %171 = vector.extract_strided_slice %166 {offsets = [0, 96], sizes = [2, 32], strides = [1, 1]} : vector<2x128xf32> to vector<2x32xf32>
    %172 = math.tanh %170 : vector<2x32xf32>
    %173 = arith.mulf %171, %172 : vector<2x32xf32>
    %174 = arith.truncf %160 : vector<2x32xf32> to vector<2x32xbf16>
    %c0_26 = arith.constant 0 : index
    %c0_27 = arith.constant 0 : index
    %175 = vector.load %arg4[%c0_26, %c0_27] : memref<32x4xbf16, #tpu.memory_space<vmem>>, vector<32x4xbf16>
    %cst_28 = arith.constant dense<0.000000e+00> : vector<2x4xf32>
    %176 = tpu.matmul %174, %175, %cst_28 {dimension_numbers = #tpu.dot_dimension_numbers<[1], [0], [0], [1], [0, 0, 1, 1], [], []>} : vector<2x32xbf16>, vector<32x4xbf16>, vector<2x4xf32> -> vector<2x4xf32>
    %177 = arith.truncf %173 : vector<2x32xf32> to vector<2x32xbf16>
    %c0_29 = arith.constant 0 : index
    %c0_30 = arith.constant 0 : index
    %178 = vector.load %arg5[%c0_29, %c0_30] : memref<32x4xbf16, #tpu.memory_space<vmem>>, vector<32x4xbf16>
    %cst_31 = arith.constant dense<0.000000e+00> : vector<2x4xf32>
    %179 = tpu.matmul %177, %178, %cst_31 {dimension_numbers = #tpu.dot_dimension_numbers<[1], [0], [0], [1], [0, 0, 1, 1], [], []>} : vector<2x32xbf16>, vector<32x4xbf16>, vector<2x4xf32> -> vector<2x4xf32>
    %180 = arith.addf %176, %179 : vector<2x4xf32>
    %c0_32 = arith.constant 0 : index
    %c0_33 = arith.constant 0 : index
    %181 = vector.load %arg6[%c0_32, %c0_33] : memref<1x4xf32, #tpu.memory_space<vmem>>, vector<1x4xf32>
    %182 = vector.broadcast %181 : vector<1x4xf32> to vector<2x4xf32>
    %183 = arith.addf %180, %182 : vector<2x4xf32>
    %c0_34 = arith.constant 0 : index
    %c0_35 = arith.constant 0 : index
    %184 = vector.load %arg7[%c0_34, %c0_35] : memref<2x4xf32, #tpu.memory_space<vmem>>, vector<2x4xf32>
    tpu.vector_store %arg7[%c0_34, %c0_35], %183 {strides = array<i32>} : memref<2x4xf32, #tpu.memory_space<vmem>>, vector<2x4xf32>,
    return
  }
}

</mosaic_0001>

<llo_original>
// kernel: tpu_custom_call.1
$region0: #{tpu_custom_call.1}
  #allocation0 [shape = 'u32[]', space=smem, size = 0x4, offset = 0x4, fixed_abs, tag = 'smem constant byte address 0x4 - core index']
  #allocation1 [shape = 'u32[144,128]{1,0:T(1,128)}', space=vmem, size = 0x12000, scoped, tag = 'internal scratch']
  %s0 = inlined_call_operand.hbm [shape: bf16[16,16], index: 0, kind: input, shape index: {}]
  %s1 = inlined_call_operand.vmem [shape: bf16[16,256], index: 1, kind: input, shape index: {}]
  %s2 = inlined_call_operand.vmem [shape: f32[1,256], index: 2, kind: input, shape index: {}]
  %s3 = inlined_call_operand.vmem [shape: bf16[32,128], index: 3, kind: input, shape index: {}]
  %s4 = inlined_call_operand.vmem [shape: bf16[32,4], index: 4, kind: input, shape index: {}]
  %s5 = inlined_call_operand.vmem [shape: bf16[32,4], index: 5, kind: input, shape index: {}]
  %s6 = inlined_call_operand.vmem [shape: f32[1,4], index: 6, kind: input, shape index: {}]
  %s7 = inlined_call_operand.hbm [shape: f32[2,4], index: 7, kind: output, shape index: {}]
  %s8 = sld [smem:[#allocation0]]
  $region42: #{tpu_custom_call.1} parent=0
    _
  %s10 = ssub.s32 1, %s8
  %s11 = scalar_select 0, %s10, %s8
  $region1: #{tpu_custom_call.1} parent=0
    #allocation2 [shape = 'u8[4096]{0}', space=vmem, size = 0x1000, scoped, tag = 'input window, operand 0, single buffered']
    #allocation3 [shape = 's32[1]{0}', space=sflag, size = 0x4, scoped, tag = 'scoped memory for tpu_custom_call.1']
    #allocation4 [shape = 's32[1]{0}', space=sflag, size = 0x4, scoped, tag = 'scoped memory for tpu_custom_call.1']
    #allocation5 [shape = 'u8[1024]{0}', space=vmem, size = 0x400, scoped, tag = 'output window, operand 0, single buffered']
    %12 = vsyncpa [#allocation3], 0
    %13 = vsyncpa [#allocation4], 0
    // Predicated region
    $region2: #{tpu_custom_call.1} parent=1 // pred_check
      _
    $region3: #{tpu_custom_call.1} parent=1 // pred_check_branch
      %15 = sbr.rel (0) target = $region5
    $region4: #{tpu_custom_call.1} parent=1 // pred_region
      %s17 = ssub.s32 128, 128
      %18 = vsyncadd [#allocation3], %s17
      %s19 = sshll.u32 [#allocation2], 4
      %s20 = int_to_ptr.vmem [resolvable:$true] %s19
      %25 = dma.hbm_to_vmem [thread:$0]  %s0, 128, %s20, [#allocation3], 64, 64, 4
    $region5: #{tpu_custom_call.1} parent=1 // pred_fallthru
      _
    // Predicated region
    $region6: #{tpu_custom_call.1} parent=1 // pred_check
      _
    $region7: #{tpu_custom_call.1} parent=1 // pred_check_branch
      %27 = sbr.rel (0) target = $region9
    $region8: #{tpu_custom_call.1} parent=1 // pred_region
      _
    $region9: #{tpu_custom_call.1} parent=1 // pred_fallthru
      _
    // Predicated region
    $region10: #{tpu_custom_call.1} parent=1 // pred_check
      _
    $region11: #{tpu_custom_call.1} parent=1 // pred_check_branch
      %29 = sbr.rel (0) target = $region13
    $region12: #{tpu_custom_call.1} parent=1 // pred_region
      _
    $region13: #{tpu_custom_call.1} parent=1 // pred_fallthru
      _
    // Predicated region
    $region14: #{tpu_custom_call.1} parent=1 // pred_check
      _
    $region15: #{tpu_custom_call.1} parent=1 // pred_check_branch
      %31 = sbr.rel (0) target = $region17
    $region16: #{tpu_custom_call.1} parent=1 // pred_region
      _
    $region17: #{tpu_custom_call.1} parent=1 // pred_fallthru
      _
    // Predicated region
    $region18: #{tpu_custom_call.1} parent=1 // pred_check
      _
    $region19: #{tpu_custom_call.1} parent=1 // pred_check_branch
      %33 = sbr.rel (0) target = $region21
    $region20: #{tpu_custom_call.1} parent=1 // pred_region
      _
    $region21: #{tpu_custom_call.1} parent=1 // pred_fallthru
      _
    // Predicated region
    $region22: #{tpu_custom_call.1} parent=1 // pred_check
      _
    $region23: #{tpu_custom_call.1} parent=1 // pred_check_branch
      %35 = sbr.rel (0) target = $region25
    $region24: #{tpu_custom_call.1} parent=1 // pred_region
      _
    $region25: #{tpu_custom_call.1} parent=1 // pred_fallthru
      _
    // Predicated region
    $region26: #{tpu_custom_call.1} parent=1 // pred_check
      _
    $region27: #{tpu_custom_call.1} parent=1 // pred_check_branch
      %37 = sbr.rel (0) target = $region29
    $region28: #{tpu_custom_call.1} parent=1 // pred_region
      _
    $region29: #{tpu_custom_call.1} parent=1 // pred_fallthru
      _
    // Predicated region
    $region30: #{tpu_custom_call.1} parent=1 // pred_check
      _
    $region31: #{tpu_custom_call.1} parent=1 // pred_check_branch
      %39 = sbr.rel (0) target = $region33
    $region32: #{tpu_custom_call.1} parent=1 // pred_region
      %40 = dma.done [#allocation3], 128
    $region33: #{tpu_custom_call.1} parent=1 // pred_fallthru
      _
    %v42 = vld [vmem:[#allocation2] sm:$0xf]
    %v43 = vld [vmem:[#allocation2 + $0x4] sm:$0xf]
    %v44 = vld [vmem:[%s1] sm:$0xff]
    %v45 = vld [vmem:[%s1 + $0x8] sm:$0xff]
    %v46 = vld [vmem:[%s2] sm:$0x3]
    %v48 = vlaneseq
    %v49 = vshrl.u32 %v48, 7
    %v50 = vsub.s32 0, %v49
    %v51 = vrot.slane %v46, %v50
    %v52 = vlaneseq
    %v53 = vshrl.u32 %v52, 7
    %v54 = vsub.s32 1, %v53
    %v55 = vrot.slane %v46, %v54
    %v60 = vunpack.c.l.b16 %v42
    %v61 = vunpack.c.l.b16 %v43
    %v62 = vpack.c.b16 %v61, %v60
    %v65 = vunpack.c.l.b16 %v44
    %v66 = vunpack.c.h.b16 %v44
    %v67 = vunpack.c.l.b16 %v45
    %v68 = vunpack.c.h.b16 %v45
    %v69 = vpack.c.b16 %v67, %v65
    %v70 = vpack.c.b16 %v68, %v66
    %vm73 = vcmask 130048
    %v75 = vsel %vm73, %v62, 0
    %77 = vmatprep.subr.bf16.mxu0 %v70
    %78 = vmatpush1.bf16.msra.mxu0 %v69
    %79 = vmatprep.subr.bf16.mxu0 0
    %80 = vmatpush1.bf16.msra.mxu0 0
    %81 = vmatprep.subr.bf16.mxu0 0
    %82 = vmatpush1.bf16.msra.mxu0 0
    %83 = vmatprep.subr.bf16.mxu0 0
    %84 = vmatpush1.bf16.msra.mxu0 0
    %85 = vmatprep.subr.bf16.mxu0 0
    %86 = vmatpush1.bf16.msra.mxu0 0
    %87 = vmatprep.subr.bf16.mxu0 0
    %88 = vmatpush1.bf16.msra.mxu0 0
    %89 = vmatprep.subr.bf16.mxu0 0
    %90 = vmatpush1.bf16.msra.mxu0 0
    %91 = vmatprep.subr.bf16.mxu0 0
    %92 = vmatpush1.bf16.msra.mxu0 0
    %93 = vmatprep.subr.bf16.mxu0 0
    %94 = vmatpush1.bf16.msra.mxu0 0
    %95 = vmatprep.subr.bf16.mxu0 0
    %96 = vmatpush1.bf16.msra.mxu0 0
    %97 = vmatprep.subr.bf16.mxu0 0
    %98 = vmatpush1.bf16.msra.mxu0 0
    %99 = vmatprep.subr.bf16.mxu0 0
    %100 = vmatpush1.bf16.msra.mxu0 0
    %101 = vmatprep.subr.bf16.mxu0 0
    %102 = vmatpush1.bf16.msra.mxu0 0
    %103 = vmatprep.subr.bf16.mxu0 0
    %104 = vmatpush1.bf16.msra.mxu0 0
    %105 = vmatprep.subr.bf16.mxu0 0
    %106 = vmatpush1.bf16.msra.mxu0 0
    %107 = vmatprep.subr.bf16.mxu0 0
    %108 = vmatpush1.bf16.msra.mxu0 0
    %109 = vmatprep.mubr.bf16.mxu0 0
    %110 = vmatmul.mubr.bf16.gmra.mrb[0].mxu0 %v75
    %v111 = vpop.f32.mrb[0].mxu0
    %v112 = vadd.f32 %v51, %v111
    %v113 = vpop.f32.mrb[0].mxu0
    %v114 = vpop.f32.mrb[0].mxu0
    %v115 = vadd.f32 %v51, %v114
    %v116 = vpop.f32.mrb[0].mxu0
    %v117 = vadd.f32 %v55, %v116
    %118 = vdwg.mxu0
    %v119 = vld [vmem:[%s3] sm:$0xf]
    %v120 = vld [vmem:[%s3 + $0x4] sm:$0xf]
    %v121 = vld [vmem:[%s3 + $0x8] sm:$0xf]
    %v122 = vld [vmem:[%s3 + $0xc] sm:$0xf]
    %v127 = vunpack.c.l.b16 %v119
    %v128 = vunpack.c.l.b16 %v120
    %v129 = vunpack.c.l.b16 %v121
    %v130 = vunpack.c.l.b16 %v122
    %v131 = vpack.c.b16 %v128, %v127
    %v132 = vpack.c.b16 %v130, %v129
    %vm135 = vcmask 261120
    %v137 = vsel %vm135, 0, 0
    %139 = vmatprep.subr.bf16.mxu0 0
    %140 = vmatpush1.bf16.msra.mxu0 %v131
    %141 = vmatprep.subr.bf16.mxu0 0
    %142 = vmatpush1.bf16.msra.mxu0 %v132
    %143 = vmatprep.subr.bf16.mxu0 0
    %144 = vmatpush1.bf16.msra.mxu0 0
    %145 = vmatprep.subr.bf16.mxu0 0
    %146 = vmatpush1.bf16.msra.mxu0 0
    %147 = vmatprep.subr.bf16.mxu0 0
    %148 = vmatpush1.bf16.msra.mxu0 0
    %149 = vmatprep.subr.bf16.mxu0 0
    %150 = vmatpush1.bf16.msra.mxu0 0
    %151 = vmatprep.subr.bf16.mxu0 0
    %152 = vmatpush1.bf16.msra.mxu0 0
    %153 = vmatprep.subr.bf16.mxu0 0
    %154 = vmatpush1.bf16.msra.mxu0 0
    %155 = vmatprep.subr.bf16.mxu0 0
    %156 = vmatpush1.bf16.msra.mxu0 0
    %157 = vmatprep.subr.bf16.mxu0 0
    %158 = vmatpush1.bf16.msra.mxu0 0
    %159 = vmatprep.subr.bf16.mxu0 0
    %160 = vmatpush1.bf16.msra.mxu0 0
    %161 = vmatprep.subr.bf16.mxu0 0
    %162 = vmatpush1.bf16.msra.mxu0 0
    %163 = vmatprep.subr.bf16.mxu0 0
    %164 = vmatpush1.bf16.msra.mxu0 0
    %165 = vmatprep.subr.bf16.mxu0 0
    %166 = vmatpush1.bf16.msra.mxu0 0
    %167 = vmatprep.subr.bf16.mxu0 0
    %168 = vmatpush1.bf16.msra.mxu0 0
    %169 = vmatprep.subr.bf16.mxu0 0
    %170 = vmatpush1.bf16.msra.mxu0 0
    %171 = vmatprep.mubr.bf16.mxu0 0
    %172 = vmatmul.mubr.bf16.gmra.mrb[0].mxu0 %v137
    %v173 = vpop.f32.mrb[0].mxu0
    %v174 = vadd.f32 0.0, %v173
    %v175 = vpop.f32.mrb[0].mxu0
    %v176 = vpop.f32.mrb[0].mxu0
    %v177 = vpop.f32.mrb[0].mxu0
    %178 = vdwg.mxu0
    %v179 = vadd.f32 %v112, %v174
    %v180 = vxor.u32 %v179, 2147483648
    %v181 = vmul.f32 %v180, 1.442695
    %v182 = vpow.pop %v181
    %v183 = vadd.f32 %v182, 1.0
    %v184 = vrcp.pop %v183
    %v185 = vmul.f32 1.0, %v184
    %v186 = vtanh.pop %v179
    %v187 = vmul.f32 %v185, 0.0
    %189 = vrot.lane.b32.xlu0 %v186, 64
    %v190 = vpop.permute.xlu0 %189
    %v192 = vmul.f32 %v185, %v190
    %194 = vrot.lane.b32.xlu0 %v192, 32
    %v195 = vpop.permute.xlu0 %194
    %v197 = vadd.f32 %v187, %v195
    %v198 = vtanh.pop %v197
    %200 = vrot.lane.b32.xlu0 %v198, 64
    %v201 = vpop.permute.xlu0 %200
    %v203 = vmul.f32 %v185, %v201
    %v204 = vpack.c.bf16 %v203, %v203
    %206 = vrot.lane.b32.xlu0 %v204, 32
    %v207 = vpop.permute.xlu0 %206
    %v209 = vsel %vm135, %v207, 0
    %211 = vmatprep.subr.bf16.mxu0 0
    %212 = vmatpush1.bf16.msra.mxu0 %v131
    %213 = vmatprep.subr.bf16.mxu0 0
    %214 = vmatpush1.bf16.msra.mxu0 %v132
    %215 = vmatprep.subr.bf16.mxu0 0
    %216 = vmatpush1.bf16.msra.mxu0 0
    %217 = vmatprep.subr.bf16.mxu0 0
    %218 = vmatpush1.bf16.msra.mxu0 0
    %219 = vmatprep.subr.bf16.mxu0 0
    %220 = vmatpush1.bf16.msra.mxu0 0
    %221 = vmatprep.subr.bf16.mxu0 0
    %222 = vmatpush1.bf16.msra.mxu0 0
    %223 = vmatprep.subr.bf16.mxu0 0
    %224 = vmatpush1.bf16.msra.mxu0 0
    %225 = vmatprep.subr.bf16.mxu0 0
    %226 = vmatpush1.bf16.msra.mxu0 0
    %227 = vmatprep.subr.bf16.mxu0 0
    %228 = vmatpush1.bf16.msra.mxu0 0
    %229 = vmatprep.subr.bf16.mxu0 0
    %230 = vmatpush1.bf16.msra.mxu0 0
    %231 = vmatprep.subr.bf16.mxu0 0
    %232 = vmatpush1.bf16.msra.mxu0 0
    %233 = vmatprep.subr.bf16.mxu0 0
    %234 = vmatpush1.bf16.msra.mxu0 0
    %235 = vmatprep.subr.bf16.mxu0 0
    %236 = vmatpush1.bf16.msra.mxu0 0
    %237 = vmatprep.subr.bf16.mxu0 0
    %238 = vmatpush1.bf16.msra.mxu0 0
    %239 = vmatprep.subr.bf16.mxu0 0
    %240 = vmatpush1.bf16.msra.mxu0 0
    %241 = vmatprep.subr.bf16.mxu0 0
    %242 = vmatpush1.bf16.msra.mxu0 0
    %243 = vmatprep.mubr.bf16.mxu0 0
    %244 = vmatmul.mubr.bf16.gmra.mrb[0].mxu0 %v209
    %v245 = vpop.f32.mrb[0].mxu0
    %v246 = vadd.f32 0.0, %v245
    %v247 = vpop.f32.mrb[0].mxu0
    %v248 = vpop.f32.mrb[0].mxu0
    %v249 = vpop.f32.mrb[0].mxu0
    %250 = vdwg.mxu0
    %v252 = vrot.slane %v246, 6
    %v254 = vadd.f32 %v112, %v252
    %v255 = vxor.u32 %v254, 2147483648
    %v256 = vmul.f32 %v255, 1.442695
    %v257 = vpow.pop %v256
    %v258 = vadd.f32 %v257, 1.0
    %v259 = vrcp.pop %v258
    %v260 = vmul.f32 1.0, %v259
    %v261 = vtanh.pop %v254
    %v263 = vrot.slane %v197, 6
    %v265 = vmul.f32 %v260, %v263
    %267 = vrot.lane.b32.xlu0 %v261, 64
    %v268 = vpop.permute.xlu0 %267
    %v270 = vmul.f32 %v260, %v268
    %272 = vrot.lane.b32.xlu0 %v270, 32
    %v273 = vpop.permute.xlu0 %272
    %v275 = vadd.f32 %v265, %v273
    %v276 = vtanh.pop %v275
    %278 = vrot.lane.b32.xlu0 %v276, 64
    %v279 = vpop.permute.xlu0 %278
    %v281 = vmul.f32 %v260, %v279
    %v282 = vpack.c.bf16 %v281, %v281
    %v284 = vrot.slane %v282, 1
    %285 = vrot.lane.b32.xlu0 %v284, 32
    %v286 = vpop.permute.xlu0 %285
    %v288 = vsel %vm135, %v286, 0
    %290 = vmatprep.subr.bf16.mxu0 0
    %291 = vmatpush1.bf16.msra.mxu0 %v131
    %292 = vmatprep.subr.bf16.mxu0 0
    %293 = vmatpush1.bf16.msra.mxu0 %v132
    %294 = vmatprep.subr.bf16.mxu0 0
    %295 = vmatpush1.bf16.msra.mxu0 0
    %296 = vmatprep.subr.bf16.mxu0 0
    %297 = vmatpush1.bf16.msra.mxu0 0
    %298 = vmatprep.subr.bf16.mxu0 0
    %299 = vmatpush1.bf16.msra.mxu0 0
    %300 = vmatprep.subr.bf16.mxu0 0
    %301 = vmatpush1.bf16.msra.mxu0 0
    %302 = vmatprep.subr.bf16.mxu0 0
    %303 = vmatpush1.bf16.msra.mxu0 0
    %304 = vmatprep.subr.bf16.mxu0 0
    %305 = vmatpush1.bf16.msra.mxu0 0
    %306 = vmatprep.subr.bf16.mxu0 0
    %307 = vmatpush1.bf16.msra.mxu0 0
    %308 = vmatprep.subr.bf16.mxu0 0
    %309 = vmatpush1.bf16.msra.mxu0 0
    %310 = vmatprep.subr.bf16.mxu0 0
    %311 = vmatpush1.bf16.msra.mxu0 0
    %312 = vmatprep.subr.bf16.mxu0 0
    %313 = vmatpush1.bf16.msra.mxu0 0
    %314 = vmatprep.subr.bf16.mxu0 0
    %315 = vmatpush1.bf16.msra.mxu0 0
    %316 = vmatprep.subr.bf16.mxu0 0
    %317 = vmatpush1.bf16.msra.mxu0 0
    %318 = vmatprep.subr.bf16.mxu0 0
    %319 = vmatpush1.bf16.msra.mxu0 0
    %320 = vmatprep.subr.bf16.mxu0 0
    %321 = vmatpush1.bf16.msra.mxu0 0
    %322 = vmatprep.mubr.bf16.mxu0 0
    %323 = vmatmul.mubr.bf16.gmra.mrb[0].mxu0 %v288
    %v324 = vpop.f32.mrb[0].mxu0
    %v325 = vadd.f32 0.0, %v324
    %v326 = vpop.f32.mrb[0].mxu0
    %v327 = vpop.f32.mrb[0].mxu0
    %v328 = vpop.f32.mrb[0].mxu0
    %329 = vdwg.mxu0
    %v331 = vrot.slane %v325, 4
    %v333 = vadd.f32 %v112, %v331
    %v334 = vxor.u32 %v333, 2147483648
    %v335 = vmul.f32 %v334, 1.442695
    %v336 = vpow.pop %v335
    %v337 = vadd.f32 %v336, 1.0
    %v338 = vrcp.pop %v337
    %v339 = vmul.f32 1.0, %v338
    %v340 = vtanh.pop %v333
    %v342 = vrot.slane %v275, 6
    %v344 = vmul.f32 %v339, %v342
    %346 = vrot.lane.b32.xlu0 %v340, 64
    %v347 = vpop.permute.xlu0 %346
    %v349 = vmul.f32 %v339, %v347
    %351 = vrot.lane.b32.xlu0 %v349, 32
    %v352 = vpop.permute.xlu0 %351
    %v354 = vadd.f32 %v344, %v352
    %v355 = vtanh.pop %v354
    %357 = vrot.lane.b32.xlu0 %v355, 64
    %v358 = vpop.permute.xlu0 %357
    %v360 = vmul.f32 %v339, %v358
    %v361 = vpack.c.bf16 %v360, %v360
    %v363 = vrot.slane %v361, 2
    %364 = vrot.lane.b32.xlu0 %v363, 32
    %v365 = vpop.permute.xlu0 %364
    %v367 = vsel %vm135, %v365, 0
    %369 = vmatprep.subr.bf16.mxu0 0
    %370 = vmatpush1.bf16.msra.mxu0 %v131
    %371 = vmatprep.subr.bf16.mxu0 0
    %372 = vmatpush1.bf16.msra.mxu0 %v132
    %373 = vmatprep.subr.bf16.mxu0 0
    %374 = vmatpush1.bf16.msra.mxu0 0
    %375 = vmatprep.subr.bf16.mxu0 0
    %376 = vmatpush1.bf16.msra.mxu0 0
    %377 = vmatprep.subr.bf16.mxu0 0
    %378 = vmatpush1.bf16.msra.mxu0 0
    %379 = vmatprep.subr.bf16.mxu0 0
    %380 = vmatpush1.bf16.msra.mxu0 0
    %381 = vmatprep.subr.bf16.mxu0 0
    %382 = vmatpush1.bf16.msra.mxu0 0
    %383 = vmatprep.subr.bf16.mxu0 0
    %384 = vmatpush1.bf16.msra.mxu0 0
    %385 = vmatprep.subr.bf16.mxu0 0
    %386 = vmatpush1.bf16.msra.mxu0 0
    %387 = vmatprep.subr.bf16.mxu0 0
    %388 = vmatpush1.bf16.msra.mxu0 0
    %389 = vmatprep.subr.bf16.mxu0 0
    %390 = vmatpush1.bf16.msra.mxu0 0
    %391 = vmatprep.subr.bf16.mxu0 0
    %392 = vmatpush1.bf16.msra.mxu0 0
    %393 = vmatprep.subr.bf16.mxu0 0
    %394 = vmatpush1.bf16.msra.mxu0 0
    %395 = vmatprep.subr.bf16.mxu0 0
    %396 = vmatpush1.bf16.msra.mxu0 0
    %397 = vmatprep.subr.bf16.mxu0 0
    %398 = vmatpush1.bf16.msra.mxu0 0
    %399 = vmatprep.subr.bf16.mxu0 0
    %400 = vmatpush1.bf16.msra.mxu0 0
    %401 = vmatprep.mubr.bf16.mxu0 0
    %402 = vmatmul.mubr.bf16.gmra.mrb[0].mxu0 %v367
    %v403 = vpop.f32.mrb[0].mxu0
    %v404 = vadd.f32 0.0, %v403
    %v405 = vpop.f32.mrb[0].mxu0
    %v406 = vpop.f32.mrb[0].mxu0
    %v407 = vpop.f32.mrb[0].mxu0
    %408 = vdwg.mxu0
    %v410 = vrot.slane %v404, 2
    %v412 = vadd.f32 %v112, %v410
    %v413 = vxor.u32 %v412, 2147483648
    %v414 = vmul.f32 %v413, 1.442695
    %v415 = vpow.pop %v414
    %v416 = vadd.f32 %v415, 1.0
    %v417 = vrcp.pop %v416
    %v418 = vmul.f32 1.0, %v417
    %v419 = vtanh.pop %v412
    %v421 = vrot.slane %v354, 6
    %v423 = vmul.f32 %v418, %v421
    %425 = vrot.lane.b32.xlu0 %v419, 64
    %v426 = vpop.permute.xlu0 %425
    %v428 = vmul.f32 %v418, %v426
    %430 = vrot.lane.b32.xlu0 %v428, 32
    %v431 = vpop.permute.xlu0 %430
    %v433 = vadd.f32 %v423, %v431
    %v434 = vtanh.pop %v433
    %436 = vrot.lane.b32.xlu0 %v434, 64
    %v437 = vpop.permute.xlu0 %436
    %v439 = vmul.f32 %v418, %v437
    %v440 = vpack.c.bf16 %v439, %v439
    %v442 = vrot.slane %v440, 3
    %443 = vrot.lane.b32.xlu0 %v442, 32
    %v444 = vpop.permute.xlu0 %443
    %v446 = vsel %vm135, %v444, 0
    %448 = vmatprep.subr.bf16.mxu0 0
    %449 = vmatpush1.bf16.msra.mxu0 %v131
    %450 = vmatprep.subr.bf16.mxu0 0
    %451 = vmatpush1.bf16.msra.mxu0 %v132
    %452 = vmatprep.subr.bf16.mxu0 0
    %453 = vmatpush1.bf16.msra.mxu0 0
    %454 = vmatprep.subr.bf16.mxu0 0
    %455 = vmatpush1.bf16.msra.mxu0 0
    %456 = vmatprep.subr.bf16.mxu0 0
    %457 = vmatpush1.bf16.msra.mxu0 0
    %458 = vmatprep.subr.bf16.mxu0 0
    %459 = vmatpush1.bf16.msra.mxu0 0
    %460 = vmatprep.subr.bf16.mxu0 0
    %461 = vmatpush1.bf16.msra.mxu0 0
    %462 = vmatprep.subr.bf16.mxu0 0
    %463 = vmatpush1.bf16.msra.mxu0 0
    %464 = vmatprep.subr.bf16.mxu0 0
    %465 = vmatpush1.bf16.msra.mxu0 0
    %466 = vmatprep.subr.bf16.mxu0 0
    %467 = vmatpush1.bf16.msra.mxu0 0
    %468 = vmatprep.subr.bf16.mxu0 0
    %469 = vmatpush1.bf16.msra.mxu0 0
    %470 = vmatprep.subr.bf16.mxu0 0
    %471 = vmatpush1.bf16.msra.mxu0 0
    %472 = vmatprep.subr.bf16.mxu0 0
    %473 = vmatpush1.bf16.msra.mxu0 0
    %474 = vmatprep.subr.bf16.mxu0 0
    %475 = vmatpush1.bf16.msra.mxu0 0
    %476 = vmatprep.subr.bf16.mxu0 0
    %477 = vmatpush1.bf16.msra.mxu0 0
    %478 = vmatprep.subr.bf16.mxu0 0
    %479 = vmatpush1.bf16.msra.mxu0 0
    %480 = vmatprep.mubr.bf16.mxu0 0
    %481 = vmatmul.mubr.bf16.gmra.mrb[0].mxu0 %v446
    %v482 = vpop.f32.mrb[0].mxu0
    %v483 = vadd.f32 0.0, %v482
    %v484 = vpop.f32.mrb[0].mxu0
    %v485 = vpop.f32.mrb[0].mxu0
    %v486 = vpop.f32.mrb[0].mxu0
    %487 = vdwg.mxu0
    %v488 = vadd.f32 %v115, %v483
    %v489 = vxor.u32 %v488, 2147483648
    %v490 = vmul.f32 %v489, 1.442695
    %v491 = vpow.pop %v490
    %v492 = vadd.f32 %v491, 1.0
    %v493 = vrcp.pop %v492
    %v494 = vmul.f32 1.0, %v493
    %v495 = vtanh.pop %v488
    %v497 = vrot.slane %v433, 6
    %v499 = vmul.f32 %v494, %v497
    %501 = vrot.lane.b32.xlu0 %v495, 64
    %v502 = vpop.permute.xlu0 %501
    %v504 = vmul.f32 %v494, %v502
    %506 = vrot.lane.b32.xlu0 %v504, 32
    %v507 = vpop.permute.xlu0 %506
    %v509 = vadd.f32 %v499, %v507
    %v510 = vtanh.pop %v509
    %512 = vrot.lane.b32.xlu0 %v510, 64
    %v513 = vpop.permute.xlu0 %512
    %v515 = vmul.f32 %v494, %v513
    %v516 = vpack.c.bf16 %v515, %v515
    %518 = vrot.lane.b32.xlu0 %v516, 32
    %v519 = vpop.permute.xlu0 %518
    %v521 = vsel %vm135, %v519, 0
    %523 = vmatprep.subr.bf16.mxu0 0
    %524 = vmatpush1.bf16.msra.mxu0 %v131
    %525 = vmatprep.subr.bf16.mxu0 0
    %526 = vmatpush1.bf16.msra.mxu0 %v132
    %527 = vmatprep.subr.bf16.mxu0 0
    %528 = vmatpush1.bf16.msra.mxu0 0
    %529 = vmatprep.subr.bf16.mxu0 0
    %530 = vmatpush1.bf16.msra.mxu0 0
    %531 = vmatprep.subr.bf16.mxu0 0
    %532 = vmatpush1.bf16.msra.mxu0 0
    %533 = vmatprep.subr.bf16.mxu0 0
    %534 = vmatpush1.bf16.msra.mxu0 0
    %535 = vmatprep.subr.bf16.mxu0 0
    %536 = vmatpush1.bf16.msra.mxu0 0
    %537 = vmatprep.subr.bf16.mxu0 0
    %538 = vmatpush1.bf16.msra.mxu0 0
    %539 = vmatprep.subr.bf16.mxu0 0
    %540 = vmatpush1.bf16.msra.mxu0 0
    %541 = vmatprep.subr.bf16.mxu0 0
    %542 = vmatpush1.bf16.msra.mxu0 0
    %543 = vmatprep.subr.bf16.mxu0 0
    %544 = vmatpush1.bf16.msra.mxu0 0
    %545 = vmatprep.subr.bf16.mxu0 0
    %546 = vmatpush1.bf16.msra.mxu0 0
    %547 = vmatprep.subr.bf16.mxu0 0
    %548 = vmatpush1.bf16.msra.mxu0 0
    %549 = vmatprep.subr.bf16.mxu0 0
    %550 = vmatpush1.bf16.msra.mxu0 0
    %551 = vmatprep.subr.bf16.mxu0 0
    %552 = vmatpush1.bf16.msra.mxu0 0
    %553 = vmatprep.subr.bf16.mxu0 0
    %554 = vmatpush1.bf16.msra.mxu0 0
    %555 = vmatprep.mubr.bf16.mxu0 0
    %556 = vmatmul.mubr.bf16.gmra.mrb[0].mxu0 %v521
    %v557 = vpop.f32.mrb[0].mxu0
    %v558 = vadd.f32 0.0, %v557
    %v559 = vpop.f32.mrb[0].mxu0
    %v560 = vpop.f32.mrb[0].mxu0
    %v561 = vpop.f32.mrb[0].mxu0
    %562 = vdwg.mxu0
    %v564 = vrot.slane %v558, 6
    %v566 = vadd.f32 %v115, %v564
    %v567 = vxor.u32 %v566, 2147483648
    %v568 = vmul.f32 %v567, 1.442695
    %v569 = vpow.pop %v568
    %v570 = vadd.f32 %v569, 1.0
    %v571 = vrcp.pop %v570
    %v572 = vmul.f32 1.0, %v571
    %v573 = vtanh.pop %v566
    %v575 = vrot.slane %v509, 6
    %v577 = vmul.f32 %v572, %v575
    %579 = vrot.lane.b32.xlu0 %v573, 64
    %v580 = vpop.permute.xlu0 %579
    %v582 = vmul.f32 %v572, %v580
    %584 = vrot.lane.b32.xlu0 %v582, 32
    %v585 = vpop.permute.xlu0 %584
    %v587 = vadd.f32 %v577, %v585
    %v588 = vtanh.pop %v587
    %590 = vrot.lane.b32.xlu0 %v588, 64
    %v591 = vpop.permute.xlu0 %590
    %v593 = vmul.f32 %v572, %v591
    %v594 = vpack.c.bf16 %v593, %v593
    %v596 = vrot.slane %v594, 1
    %597 = vrot.lane.b32.xlu0 %v596, 32
    %v598 = vpop.permute.xlu0 %597
    %v600 = vsel %vm135, %v598, 0
    %602 = vmatprep.subr.bf16.mxu0 0
    %603 = vmatpush1.bf16.msra.mxu0 %v131
    %604 = vmatprep.subr.bf16.mxu0 0
    %605 = vmatpush1.bf16.msra.mxu0 %v132
    %606 = vmatprep.subr.bf16.mxu0 0
    %607 = vmatpush1.bf16.msra.mxu0 0
    %608 = vmatprep.subr.bf16.mxu0 0
    %609 = vmatpush1.bf16.msra.mxu0 0
    %610 = vmatprep.subr.bf16.mxu0 0
    %611 = vmatpush1.bf16.msra.mxu0 0
    %612 = vmatprep.subr.bf16.mxu0 0
    %613 = vmatpush1.bf16.msra.mxu0 0
    %614 = vmatprep.subr.bf16.mxu0 0
    %615 = vmatpush1.bf16.msra.mxu0 0
    %616 = vmatprep.subr.bf16.mxu0 0
    %617 = vmatpush1.bf16.msra.mxu0 0
    %618 = vmatprep.subr.bf16.mxu0 0
    %619 = vmatpush1.bf16.msra.mxu0 0
    %620 = vmatprep.subr.bf16.mxu0 0
    %621 = vmatpush1.bf16.msra.mxu0 0
    %622 = vmatprep.subr.bf16.mxu0 0
    %623 = vmatpush1.bf16.msra.mxu0 0
    %624 = vmatprep.subr.bf16.mxu0 0
    %625 = vmatpush1.bf16.msra.mxu0 0
    %626 = vmatprep.subr.bf16.mxu0 0
    %627 = vmatpush1.bf16.msra.mxu0 0
    %628 = vmatprep.subr.bf16.mxu0 0
    %629 = vmatpush1.bf16.msra.mxu0 0
    %630 = vmatprep.subr.bf16.mxu0 0
    %631 = vmatpush1.bf16.msra.mxu0 0
    %632 = vmatprep.subr.bf16.mxu0 0
    %633 = vmatpush1.bf16.msra.mxu0 0
    %634 = vmatprep.mubr.bf16.mxu0 0
    %635 = vmatmul.mubr.bf16.gmra.mrb[0].mxu0 %v600
    %v636 = vpop.f32.mrb[0].mxu0
    %v637 = vadd.f32 0.0, %v636
    %v638 = vpop.f32.mrb[0].mxu0
    %v639 = vpop.f32.mrb[0].mxu0
    %v640 = vpop.f32.mrb[0].mxu0
    %641 = vdwg.mxu0
    %v643 = vrot.slane %v637, 4
    %v645 = vadd.f32 %v115, %v643
    %v646 = vxor.u32 %v645, 2147483648
    %v647 = vmul.f32 %v646, 1.442695
    %v648 = vpow.pop %v647
    %v649 = vadd.f32 %v648, 1.0
    %v650 = vrcp.pop %v649
    %v651 = vmul.f32 1.0, %v650
    %v652 = vtanh.pop %v645
    %v654 = vrot.slane %v587, 6
    %v656 = vmul.f32 %v651, %v654
    %658 = vrot.lane.b32.xlu0 %v652, 64
    %v659 = vpop.permute.xlu0 %658
    %v661 = vmul.f32 %v651, %v659
    %663 = vrot.lane.b32.xlu0 %v661, 32
    %v664 = vpop.permute.xlu0 %663
    %v666 = vadd.f32 %v656, %v664
    %v667 = vtanh.pop %v666
    %669 = vrot.lane.b32.xlu0 %v667, 64
    %v670 = vpop.permute.xlu0 %669
    %v672 = vmul.f32 %v651, %v670
    %v673 = vpack.c.bf16 %v672, %v672
    %v675 = vrot.slane %v673, 2
    %676 = vrot.lane.b32.xlu0 %v675, 32
    %v677 = vpop.permute.xlu0 %676
    %v679 = vsel %vm135, %v677, 0
    %681 = vmatprep.subr.bf16.mxu0 0
    %682 = vmatpush1.bf16.msra.mxu0 %v131
    %683 = vmatprep.subr.bf16.mxu0 0
    %684 = vmatpush1.bf16.msra.mxu0 %v132
    %685 = vmatprep.subr.bf16.mxu0 0
    %686 = vmatpush1.bf16.msra.mxu0 0
    %687 = vmatprep.subr.bf16.mxu0 0
    %688 = vmatpush1.bf16.msra.mxu0 0
    %689 = vmatprep.subr.bf16.mxu0 0
    %690 = vmatpush1.bf16.msra.mxu0 0
    %691 = vmatprep.subr.bf16.mxu0 0
    %692 = vmatpush1.bf16.msra.mxu0 0
    %693 = vmatprep.subr.bf16.mxu0 0
    %694 = vmatpush1.bf16.msra.mxu0 0
    %695 = vmatprep.subr.bf16.mxu0 0
    %696 = vmatpush1.bf16.msra.mxu0 0
    %697 = vmatprep.subr.bf16.mxu0 0
    %698 = vmatpush1.bf16.msra.mxu0 0
    %699 = vmatprep.subr.bf16.mxu0 0
    %700 = vmatpush1.bf16.msra.mxu0 0
    %701 = vmatprep.subr.bf16.mxu0 0
    %702 = vmatpush1.bf16.msra.mxu0 0
    %703 = vmatprep.subr.bf16.mxu0 0
    %704 = vmatpush1.bf16.msra.mxu0 0
    %705 = vmatprep.subr.bf16.mxu0 0
    %706 = vmatpush1.bf16.msra.mxu0 0
    %707 = vmatprep.subr.bf16.mxu0 0
    %708 = vmatpush1.bf16.msra.mxu0 0
    %709 = vmatprep.subr.bf16.mxu0 0
    %710 = vmatpush1.bf16.msra.mxu0 0
    %711 = vmatprep.subr.bf16.mxu0 0
    %712 = vmatpush1.bf16.msra.mxu0 0
    %713 = vmatprep.mubr.bf16.mxu0 0
    %714 = vmatmul.mubr.bf16.gmra.mrb[0].mxu0 %v679
    %v715 = vpop.f32.mrb[0].mxu0
    %v716 = vadd.f32 0.0, %v715
    %v717 = vpop.f32.mrb[0].mxu0
    %v718 = vpop.f32.mrb[0].mxu0
    %v719 = vpop.f32.mrb[0].mxu0
    %720 = vdwg.mxu0
    %v722 = vrot.slane %v716, 2
    %v724 = vadd.f32 %v115, %v722
    %v725 = vxor.u32 %v724, 2147483648
    %v726 = vmul.f32 %v725, 1.442695
    %v727 = vpow.pop %v726
    %v728 = vadd.f32 %v727, 1.0
    %v729 = vrcp.pop %v728
    %v730 = vmul.f32 1.0, %v729
    %v731 = vtanh.pop %v724
    %v733 = vrot.slane %v666, 6
    %v735 = vmul.f32 %v730, %v733
    %737 = vrot.lane.b32.xlu0 %v731, 64
    %v738 = vpop.permute.xlu0 %737
    %v740 = vmul.f32 %v730, %v738
    %742 = vrot.lane.b32.xlu0 %v740, 32
    %v743 = vpop.permute.xlu0 %742
    %v745 = vadd.f32 %v735, %v743
    %v746 = vtanh.pop %v745
    %748 = vrot.lane.b32.xlu0 %v746, 64
    %v749 = vpop.permute.xlu0 %748
    %v751 = vmul.f32 %v730, %v749
    %v752 = vxor.u32 %v117, 2147483648
    %v753 = vmul.f32 %v752, 1.442695
    %v754 = vpow.pop %v753
    %v755 = vadd.f32 %v754, 1.0
    %v756 = vrcp.pop %v755
    %v757 = vmul.f32 1.0, %v756
    %v758 = vtanh.pop %v117
    %760 = vrot.lane.b32.xlu0 %v758, 64
    %v761 = vpop.permute.xlu0 %760
    %v763 = vmul.f32 %v757, %v761
    %v764 = vtanh.pop %v763
    %766 = vrot.lane.b32.xlu0 %v764, 96
    %v767 = vpop.permute.xlu0 %766
    %v769 = vmul.f32 %v757, %v767
    %v770 = vpack.c.bf16 %v751, %v751
    %v771 = vld [vmem:[%s4] sm:$0xf]
    %v772 = vld [vmem:[%s4 + $0x4] sm:$0xf]
    %v773 = vld [vmem:[%s4 + $0x8] sm:$0xf]
    %v774 = vld [vmem:[%s4 + $0xc] sm:$0xf]
    %v775 = vpack.c.bf16 %v769, %v769
    %v776 = vld [vmem:[%s5] sm:$0xf]
    %v777 = vld [vmem:[%s5 + $0x4] sm:$0xf]
    %v778 = vld [vmem:[%s5 + $0x8] sm:$0xf]
    %v779 = vld [vmem:[%s5 + $0xc] sm:$0xf]
    %v781 = vrot.slane %v775, 3
    %782 = vrot.lane.b32.xlu0 %v781, 32
    %v783 = vpop.permute.xlu0 %782
    %v788 = vunpack.c.l.b16 %v776
    %v789 = vunpack.c.l.b16 %v777
    %v790 = vunpack.c.l.b16 %v778
    %v791 = vunpack.c.l.b16 %v779
    %v792 = vpack.c.b16 %v789, %v788
    %v793 = vpack.c.b16 %v791, %v790
    %v797 = vsel %vm135, %v783, 0
    %799 = vmatprep.subr.bf16.mxu0 0
    %800 = vmatpush1.bf16.msra.mxu0 %v792
    %801 = vmatprep.subr.bf16.mxu0 0
    %802 = vmatpush1.bf16.msra.mxu0 %v793
    %803 = vmatprep.subr.bf16.mxu0 0
    %804 = vmatpush1.bf16.msra.mxu0 0
    %805 = vmatprep.subr.bf16.mxu0 0
    %806 = vmatpush1.bf16.msra.mxu0 0
    %807 = vmatprep.subr.bf16.mxu0 0
    %808 = vmatpush1.bf16.msra.mxu0 0
    %809 = vmatprep.subr.bf16.mxu0 0
    %810 = vmatpush1.bf16.msra.mxu0 0
    %811 = vmatprep.subr.bf16.mxu0 0
    %812 = vmatpush1.bf16.msra.mxu0 0
    %813 = vmatprep.subr.bf16.mxu0 0
    %814 = vmatpush1.bf16.msra.mxu0 0
    %815 = vmatprep.subr.bf16.mxu0 0
    %816 = vmatpush1.bf16.msra.mxu0 0
    %817 = vmatprep.subr.bf16.mxu0 0
    %818 = vmatpush1.bf16.msra.mxu0 0
    %819 = vmatprep.subr.bf16.mxu0 0
    %820 = vmatpush1.bf16.msra.mxu0 0
    %821 = vmatprep.subr.bf16.mxu0 0
    %822 = vmatpush1.bf16.msra.mxu0 0
    %823 = vmatprep.subr.bf16.mxu0 0
    %824 = vmatpush1.bf16.msra.mxu0 0
    %825 = vmatprep.subr.bf16.mxu0 0
    %826 = vmatpush1.bf16.msra.mxu0 0
    %827 = vmatprep.subr.bf16.mxu0 0
    %828 = vmatpush1.bf16.msra.mxu0 0
    %829 = vmatprep.subr.bf16.mxu0 0
    %830 = vmatpush1.bf16.msra.mxu0 0
    %831 = vmatprep.mubr.bf16.mxu0 0
    %832 = vmatmul.mubr.bf16.gmra.mrb[0].mxu0 %v797
    %v833 = vpop.f32.mrb[0].mxu0
    %v834 = vadd.f32 0.0, %v833
    %v835 = vpop.f32.mrb[0].mxu0
    %v836 = vpop.f32.mrb[0].mxu0
    %v837 = vpop.f32.mrb[0].mxu0
    %838 = vdwg.mxu0
    %v840 = vrot.slane %v770, 3
    %841 = vrot.lane.b32.xlu0 %v840, 32
    %v842 = vpop.permute.xlu0 %841
    %v847 = vunpack.c.l.b16 %v771
    %v848 = vunpack.c.l.b16 %v772
    %v849 = vunpack.c.l.b16 %v773
    %v850 = vunpack.c.l.b16 %v774
    %v851 = vpack.c.b16 %v848, %v847
    %v852 = vpack.c.b16 %v850, %v849
    %v856 = vsel %vm135, %v842, 0
    %858 = vmatprep.subr.bf16.mxu0 0
    %859 = vmatpush1.bf16.msra.mxu0 %v851
    %860 = vmatprep.subr.bf16.mxu0 0
    %861 = vmatpush1.bf16.msra.mxu0 %v852
    %862 = vmatprep.subr.bf16.mxu0 0
    %863 = vmatpush1.bf16.msra.mxu0 0
    %864 = vmatprep.subr.bf16.mxu0 0
    %865 = vmatpush1.bf16.msra.mxu0 0
    %866 = vmatprep.subr.bf16.mxu0 0
    %867 = vmatpush1.bf16.msra.mxu0 0
    %868 = vmatprep.subr.bf16.mxu0 0
    %869 = vmatpush1.bf16.msra.mxu0 0
    %870 = vmatprep.subr.bf16.mxu0 0
    %871 = vmatpush1.bf16.msra.mxu0 0
    %872 = vmatprep.subr.bf16.mxu0 0
    %873 = vmatpush1.bf16.msra.mxu0 0
    %874 = vmatprep.subr.bf16.mxu0 0
    %875 = vmatpush1.bf16.msra.mxu0 0
    %876 = vmatprep.subr.bf16.mxu0 0
    %877 = vmatpush1.bf16.msra.mxu0 0
    %878 = vmatprep.subr.bf16.mxu0 0
    %879 = vmatpush1.bf16.msra.mxu0 0
    %880 = vmatprep.subr.bf16.mxu0 0
    %881 = vmatpush1.bf16.msra.mxu0 0
    %882 = vmatprep.subr.bf16.mxu0 0
    %883 = vmatpush1.bf16.msra.mxu0 0
    %884 = vmatprep.subr.bf16.mxu0 0
    %885 = vmatpush1.bf16.msra.mxu0 0
    %886 = vmatprep.subr.bf16.mxu0 0
    %887 = vmatpush1.bf16.msra.mxu0 0
    %888 = vmatprep.subr.bf16.mxu0 0
    %889 = vmatpush1.bf16.msra.mxu0 0
    %890 = vmatprep.mubr.bf16.mxu0 0
    %891 = vmatmul.mubr.bf16.gmra.mrb[0].mxu0 %v856
    %v892 = vpop.f32.mrb[0].mxu0
    %v893 = vadd.f32 %v834, %v892
    %v894 = vpop.f32.mrb[0].mxu0
    %v895 = vpop.f32.mrb[0].mxu0
    %v896 = vpop.f32.mrb[0].mxu0
    %897 = vdwg.mxu0
    %v898 = vld [vmem:[%s6] sm:$0x1]
    %v900 = vlaneseq
    %v901 = vshrl.u32 %v900, 7
    %v902 = vsub.s32 0, %v901
    %v903 = vrot.slane %v898, %v902
    %v905 = vadd.f32 %v893, %v903
    %vm906 = vcmask 25600
    %907 = vst.msk [vmem:[#allocation5] sm:$0x3] %vm906, %v905
    // Predicated region
    $region34: #{tpu_custom_call.1} parent=1 // pred_check
      _
    $region35: #{tpu_custom_call.1} parent=1 // pred_check_branch
      %909 = sbr.rel (0) target = $region37
    $region36: #{tpu_custom_call.1} parent=1 // pred_region
      %s911 = ssub.s32 32, 32
      %912 = vsyncadd [#allocation4], %s911
      %s914 = sshll.u32 [#allocation5], 4
      %s915 = int_to_ptr.vmem [resolvable:$true] %s914
      %917 = dma.vmem_to_hbm [thread:$0]  %s915, 32, %s7, [#allocation4]
    $region37: #{tpu_custom_call.1} parent=1 // pred_fallthru
      _
    // Predicated region
    $region38: #{tpu_custom_call.1} parent=1 // pred_check
      _
    $region39: #{tpu_custom_call.1} parent=1 // pred_check_branch
      %919 = sbr.rel (0) target = $region41
    $region40: #{tpu_custom_call.1} parent=1 // pred_region
      %920 = dma.done [#allocation4], 32
    $region41: #{tpu_custom_call.1} parent=1 // pred_fallthru
      _
    %921 = vsyncpa [#allocation3], 1
    %922 = vsyncpa [#allocation4], 1

</llo_original>
